<compile_context>
chip_gen: v7x
topology: tpu7x:2x2x1
jax: 0.10.0
libtpu: 0.0.40
codegen_flags: <defaults>
</compile_context>

<pallas_src>
import jax
import jax.numpy as jnp
from jax.experimental import pallas as pl
from jax.experimental.pallas import tpu as pltpu

LANE = 128       # vreg lane width
H1, H2 = 32, 16  # true hidden widths of the MLP


def _round_up(n, m):
    return (n + m - 1) // m * m


def mlp_kernel(x_ref, w1_ref, b1_ref, w2_ref, b2_ref, w3_ref, b3_ref, o_ref):
    mm_dtype = w1_ref.dtype          # matmul operand dtype (bf16 or f32)
    d_out = o_ref.shape[-1]          # true (unpadded) output width
    x = x_ref[...]                                               # (TB, D_in), pre-cast
    # layer 1: Linear(D_in, 32 -> padded 128) + ReLU  (bias/ReLU in f32)
    h1 = jnp.dot(x, w1_ref[...], preferred_element_type=jnp.float32)
    h1 = jnp.maximum(h1 + b1_ref[...], 0.0)                      # (TB, 128) f32
    # layer 2: Linear(32, 16 -> padded 128) + ReLU
    h2 = jnp.dot(h1.astype(mm_dtype), w2_ref[...],
                 preferred_element_type=jnp.float32)
    h2 = jnp.maximum(h2 + b2_ref[...], 0.0)                      # (TB, 128) f32
    # layer 3: Linear(16, d_out), no activation; store only the valid columns
    h3 = jnp.dot(h2.astype(mm_dtype), w3_ref[...],
                 preferred_element_type=jnp.float32)             # (TB, 128) f32
    o_ref[...] = (h3[:, :d_out] + b3_ref[...]).astype(o_ref.dtype)


def prepare_params(params, *, matmul_dtype=jnp.bfloat16):
    """One-time weight prep: pad hidden dims to the 128-lane vreg width and
    pre-cast weights to the matmul operand dtype. Biases stay f32; b3 stays
    unpadded (added to the sliced (TB, d_out) result in-kernel)."""
    w1, b1, w2, b2, w3, b3 = params
    d_out = w3.shape[1]
    h1p = _round_up(H1, LANE)
    h2p = _round_up(H2, LANE)
    d_out_p = _round_up(d_out, LANE)
    w1p = jnp.pad(w1, ((0, 0), (0, h1p - H1))).astype(matmul_dtype)
    b1p = jnp.pad(b1, ((0, 0), (0, h1p - H1))).astype(jnp.float32)
    w2p = jnp.pad(w2, ((0, h1p - H1), (0, h2p - H2))).astype(matmul_dtype)
    b2p = jnp.pad(b2, ((0, 0), (0, h2p - H2))).astype(jnp.float32)
    w3p = jnp.pad(w3, ((0, h2p - H2), (0, d_out_p - d_out))).astype(matmul_dtype)
    b3f = b3.astype(jnp.float32)                                 # (1, d_out), unpadded
    return (w1p, b1p, w2p, b2p, w3p, b3f)


def _choose_tb(B, block_batch):
    # Multiple of 8; aim for >=2 grid steps when possible (v7x's 2 TensorCores).
    if B <= 8:
        return B
    half = (B // 2) // 8 * 8
    return max(8, min(block_batch, half))


def net_forward(x, prepped, *, block_batch=4096, out_dtype=jnp.float32):
    w1p, b1p, w2p, b2p, w3p, b3 = prepped
    B, d_in = x.shape
    d_out = b3.shape[1]
    matmul_dtype = w1p.dtype
    if x.dtype != matmul_dtype:
        x = x.astype(matmul_dtype)   # stream x at matmul-operand precision

    tb = _choose_tb(B, block_batch)
    grid = (pl.cdiv(B, tb),)
    # NOTE: rows are independent, so a partial last batch tile is safe (OOB
    # input rows read garbage but their output rows are masked/discarded).

    x_spec = pl.BlockSpec((tb, d_in), lambda i: (i, 0))
    out_spec = pl.BlockSpec((tb, d_out), lambda i: (i, 0))
    # Constant index_map -> weights/biases DMA'd once, VMEM-resident across tiles.
    resident = lambda a: pl.BlockSpec(a.shape, lambda i: (0, 0))

    h1p_, h2p_, d_out_p = w1p.shape[1], w2p.shape[1], w3p.shape[1]
    flops = 2 * B * (d_in * h1p_ + h1p_ * h2p_ + h2p_ * d_out_p)
    bytes_accessed = (
        int(x.size) * x.dtype.itemsize
        + B * d_out * jnp.dtype(out_dtype).itemsize
        + sum(int(a.size) * a.dtype.itemsize
              for a in (w1p, b1p, w2p, b2p, w3p, b3)))

    return pl.pallas_call(
        mlp_kernel,
        out_shape=jax.ShapeDtypeStruct((B, d_out), out_dtype),
        grid=grid,
        in_specs=[
            x_spec,
            resident(w1p), resident(b1p),
            resident(w2p), resident(b2p),
            resident(w3p), resident(b3),
        ],
        out_specs=out_spec,
        compiler_params=pltpu.CompilerParams(
            dimension_semantics=("parallel",)),
        cost_estimate=pl.CostEstimate(
            flops=flops, transcendentals=0, bytes_accessed=bytes_accessed),
    )(x, w1p, b1p, w2p, b2p, w3p, b3)


def init_params(key, input_size, output_size):
    # Deterministic init mimicking nn.Linear's uniform(-1/sqrt(fan_in), 1/sqrt(fan_in)).
    def linear(key, fan_in, fan_out):
        kw, kb = jax.random.split(key)
        bound = 1.0 / jnp.sqrt(fan_in)
        w = jax.random.uniform(kw, (fan_in, fan_out), jnp.float32, -bound, bound)
        b = jax.random.uniform(kb, (1, fan_out), jnp.float32, -bound, bound)
        return w, b

    k1, k2, k3 = jax.random.split(key, 3)
    w1, b1 = linear(k1, input_size, 32)
    w2, b2 = linear(k2, 32, 16)
    w3, b3 = linear(k3, 16, output_size)
    return w1, b1, w2, b2, w3, b3


def reference_forward(x, params):
    w1, b1, w2, b2, w3, b3 = params
    h1 = jnp.maximum(x @ w1 + b1, 0.0)
    h2 = jnp.maximum(h1 @ w2 + b2, 0.0)
    return h2 @ w3 + b3


if __name__ == "__main__":
    input_size = 64
    output_size = 8
    batch = 8

    key = jax.random.PRNGKey(0)
    kx, kp = jax.random.split(key)
    x = jax.random.normal(kx, (batch, input_size), jnp.float32)
    params = init_params(kp, input_size, output_size)
    ref = reference_forward(x, params)

    fwd = jax.jit(net_forward)

    # f32 operand path: must match the f32 reference tightly.
    prepped_f32 = prepare_params(params, matmul_dtype=jnp.float32)
    out_f32 = jax.block_until_ready(fwd(x, prepped_f32))
    assert out_f32.shape == (batch, output_size), out_f32.shape
    assert jnp.allclose(out_f32, ref, atol=1e-5, rtol=1e-5), "f32 mismatch vs reference"

    # bf16-operand / f32-accumulate path (recommended default on v5e/v6e/v7x).
    prepped_bf16 = prepare_params(params)  # matmul_dtype=bf16
    out_bf16 = jax.block_until_ready(fwd(x, prepped_bf16))
    assert out_bf16.shape == (batch, output_size), out_bf16.shape
    assert jnp.allclose(out_bf16, ref, atol=1e-1, rtol=1e-1), "bf16 mismatch vs reference"

    print("KERNEL_OK")
</pallas_src>

<mosaic_0001>
module attributes {stable_mosaic.version = 11 : i64} {
  func.func @mlp_kernel(%arg0: i32, %arg1: memref<8x64xf32, #tpu.memory_space<vmem>>, %arg2: memref<64x128xf32, #tpu.memory_space<vmem>>, %arg3: memref<1x128xf32, #tpu.memory_space<vmem>>, %arg4: memref<128x128xf32, #tpu.memory_space<vmem>>, %arg5: memref<1x128xf32, #tpu.memory_space<vmem>>, %arg6: memref<128x128xf32, #tpu.memory_space<vmem>>, %arg7: memref<1x8xf32, #tpu.memory_space<vmem>>, %arg8: memref<8x8xf32, #tpu.memory_space<vmem>>) attributes {dimension_semantics = [#tpu.dimension_semantics<parallel>], iteration_bounds = array<i64: 1>, scalar_prefetch = 0 : i64, scratch_operands = 0 : i64, tpu.core_type = #tpu.core_type<tc>, window_params = [{transform_indices = @transform_0, window_bounds = array<i64: 8, 64>}, {pipeline_mode = #tpu.pipeline_mode<synchronous>, transform_indices = @transform_1, window_bounds = array<i64: 64, 128>}, {pipeline_mode = #tpu.pipeline_mode<synchronous>, transform_indices = @transform_2, window_bounds = array<i64: 1, 128>}, {pipeline_mode = #tpu.pipeline_mode<synchronous>, transform_indices = @transform_3, window_bounds = array<i64: 128, 128>}, {pipeline_mode = #tpu.pipeline_mode<synchronous>, transform_indices = @transform_4, window_bounds = array<i64: 1, 128>}, {pipeline_mode = #tpu.pipeline_mode<synchronous>, transform_indices = @transform_5, window_bounds = array<i64: 128, 128>}, {pipeline_mode = #tpu.pipeline_mode<synchronous>, transform_indices = @transform_6, window_bounds = array<i64: 1, 8>}, {transform_indices = @transform_7, window_bounds = array<i64: 8, 8>}]} {
    %c0 = arith.constant 0 : index
    %c0_0 = arith.constant 0 : index
    %0 = vector.load %arg1[%c0, %c0_0] : memref<8x64xf32, #tpu.memory_space<vmem>>, vector<8x64xf32>
    %c0_1 = arith.constant 0 : index
    %c0_2 = arith.constant 0 : index
    %1 = vector.load %arg2[%c0_1, %c0_2] : memref<64x128xf32, #tpu.memory_space<vmem>>, vector<64x128xf32>
    %cst = arith.constant dense<0.000000e+00> : vector<8x128xf32>
    %2 = tpu.matmul %0, %1, %cst {dimension_numbers = #tpu.dot_dimension_numbers<[1], [0], [0], [1], [0, 0, 1, 1], [], []>} : vector<8x64xf32>, vector<64x128xf32>, vector<8x128xf32> -> vector<8x128xf32>
    %c0_3 = arith.constant 0 : index
    %c0_4 = arith.constant 0 : index
    %3 = vector.load %arg3[%c0_3, %c0_4] : memref<1x128xf32, #tpu.memory_space<vmem>>, vector<1x128xf32>
    %4 = vector.broadcast %3 : vector<1x128xf32> to vector<8x128xf32>
    %5 = arith.addf %2, %4 : vector<8x128xf32>
    %cst_5 = arith.constant 0.000000e+00 : f32
    %6 = vector.broadcast %cst_5 : f32 to vector<8x128xf32>
    %7 = arith.maximumf %5, %6 : vector<8x128xf32>
    %c0_6 = arith.constant 0 : index
    %c0_7 = arith.constant 0 : index
    %8 = vector.load %arg4[%c0_6, %c0_7] : memref<128x128xf32, #tpu.memory_space<vmem>>, vector<128x128xf32>
    %cst_8 = arith.constant dense<0.000000e+00> : vector<8x128xf32>
    %9 = tpu.matmul %7, %8, %cst_8 {dimension_numbers = #tpu.dot_dimension_numbers<[1], [0], [0], [1], [0, 0, 1, 1], [], []>} : vector<8x128xf32>, vector<128x128xf32>, vector<8x128xf32> -> vector<8x128xf32>
    %c0_9 = arith.constant 0 : index
    %c0_10 = arith.constant 0 : index
    %10 = vector.load %arg5[%c0_9, %c0_10] : memref<1x128xf32, #tpu.memory_space<vmem>>, vector<1x128xf32>
    %11 = vector.broadcast %10 : vector<1x128xf32> to vector<8x128xf32>
    %12 = arith.addf %9, %11 : vector<8x128xf32>
    %cst_11 = arith.constant 0.000000e+00 : f32
    %13 = vector.broadcast %cst_11 : f32 to vector<8x128xf32>
    %14 = arith.maximumf %12, %13 : vector<8x128xf32>
    %c0_12 = arith.constant 0 : index
    %c0_13 = arith.constant 0 : index
    %15 = vector.load %arg6[%c0_12, %c0_13] : memref<128x128xf32, #tpu.memory_space<vmem>>, vector<128x128xf32>
    %cst_14 = arith.constant dense<0.000000e+00> : vector<8x128xf32>
    %16 = tpu.matmul %14, %15, %cst_14 {dimension_numbers = #tpu.dot_dimension_numbers<[1], [0], [0], [1], [0, 0, 1, 1], [], []>} : vector<8x128xf32>, vector<128x128xf32>, vector<8x128xf32> -> vector<8x128xf32>
    %17 = vector.extract_strided_slice %16 {offsets = [0, 0], sizes = [8, 8], strides = [1, 1]} : vector<8x128xf32> to vector<8x8xf32>
    %c0_15 = arith.constant 0 : index
    %c0_16 = arith.constant 0 : index
    %18 = vector.load %arg7[%c0_15, %c0_16] : memref<1x8xf32, #tpu.memory_space<vmem>>, vector<1x8xf32>
    %19 = vector.broadcast %18 : vector<1x8xf32> to vector<8x8xf32>
    %20 = arith.addf %17, %19 : vector<8x8xf32>
    %c0_17 = arith.constant 0 : index
    %c0_18 = arith.constant 0 : index
    %21 = vector.load %arg8[%c0_17, %c0_18] : memref<8x8xf32, #tpu.memory_space<vmem>>, vector<8x8xf32>
    tpu.vector_store %arg8[%c0_17, %c0_18], %20 {strides = array<i32>} : memref<8x8xf32, #tpu.memory_space<vmem>>, vector<8x8xf32>,
    return
  }
  func.func @transform_0(%arg0: i32) -> (i32, i32) {
    %c0_i32 = arith.constant 0 : i32
    %c0_i32_0 = arith.constant 0 : i32
    return %arg0, %c0_i32 : i32, i32
  }
  func.func @transform_1(%arg0: i32) -> (i32, i32) {
    %c0_i32 = arith.constant 0 : i32
    %c0_i32_0 = arith.constant 0 : i32
    %c0_i32_1 = arith.constant 0 : i32
    return %c0_i32, %c0_i32_0 : i32, i32
  }
  func.func @transform_2(%arg0: i32) -> (i32, i32) {
    %c0_i32 = arith.constant 0 : i32
    %c0_i32_0 = arith.constant 0 : i32
    %c0_i32_1 = arith.constant 0 : i32
    return %c0_i32, %c0_i32_0 : i32, i32
  }
  func.func @transform_3(%arg0: i32) -> (i32, i32) {
    %c0_i32 = arith.constant 0 : i32
    %c0_i32_0 = arith.constant 0 : i32
    %c0_i32_1 = arith.constant 0 : i32
    return %c0_i32, %c0_i32_0 : i32, i32
  }
  func.func @transform_4(%arg0: i32) -> (i32, i32) {
    %c0_i32 = arith.constant 0 : i32
    %c0_i32_0 = arith.constant 0 : i32
    %c0_i32_1 = arith.constant 0 : i32
    return %c0_i32, %c0_i32_0 : i32, i32
  }
  func.func @transform_5(%arg0: i32) -> (i32, i32) {
    %c0_i32 = arith.constant 0 : i32
    %c0_i32_0 = arith.constant 0 : i32
    %c0_i32_1 = arith.constant 0 : i32
    return %c0_i32, %c0_i32_0 : i32, i32
  }
  func.func @transform_6(%arg0: i32) -> (i32, i32) {
    %c0_i32 = arith.constant 0 : i32
    %c0_i32_0 = arith.constant 0 : i32
    %c0_i32_1 = arith.constant 0 : i32
    return %c0_i32, %c0_i32_0 : i32, i32
  }
  func.func @transform_7(%arg0: i32) -> (i32, i32) {
    %c0_i32 = arith.constant 0 : i32
    %c0_i32_0 = arith.constant 0 : i32
    return %arg0, %c0_i32 : i32, i32
  }
}

</mosaic_0001>

<llo_original>
// kernel: net_forward.1
$region0: #{net_forward.1}
  #allocation0 [shape = 'u32[]', space=smem, size = 0x4, offset = 0x4, fixed_abs, tag = 'smem constant byte address 0x4 - core index']
  #allocation1 [shape = 'u32[144,128]{1,0:T(1,128)}', space=vmem, size = 0x12000, scoped, tag = 'internal scratch']
  %s0 = inlined_call_operand.hbm [shape: f32[8,64], index: 0, kind: input, shape index: {}]
  %s1 = inlined_call_operand.hbm [shape: f32[64,128], index: 1, kind: input, shape index: {}]
  %s2 = inlined_call_operand.vmem [shape: f32[1,128], index: 2, kind: input, shape index: {}]
  %s3 = inlined_call_operand.hbm [shape: f32[128,128], index: 3, kind: input, shape index: {}]
  %s4 = inlined_call_operand.vmem [shape: f32[1,128], index: 4, kind: input, shape index: {}]
  %s5 = inlined_call_operand.hbm [shape: f32[128,128], index: 5, kind: input, shape index: {}]
  %s6 = inlined_call_operand.vmem [shape: f32[1,8], index: 6, kind: input, shape index: {}]
  %s7 = inlined_call_operand.hbm [shape: f32[8,8], index: 7, kind: output, shape index: {}]
  %s8 = sld [smem:[#allocation0]]
  $region54: #{net_forward.1} parent=0
    _
  %s10 = ssub.s32 1, %s8
  %s11 = scalar_select 0, %s10, %s8
  $region1: #{net_forward.1} parent=0
    #allocation2 [shape = 'u8[4096]{0}', space=vmem, size = 0x1000, scoped, tag = 'input window, operand 0, single buffered']
    #allocation3 [shape = 's32[1]{0}', space=sflag, size = 0x4, scoped, tag = 'scoped memory for net_forward.1']
    #allocation4 [shape = 's32[1]{0}', space=sflag, size = 0x4, scoped, tag = 'scoped memory for net_forward.1']
    #allocation5 [shape = 'u8[32768]{0}', space=vmem, size = 0x8000, scoped, tag = 'input window, operand 1, single buffered']
    #allocation6 [shape = 's32[1]{0}', space=sflag, size = 0x4, scoped, tag = 'scoped memory for net_forward.1']
    #allocation7 [shape = 'u8[65536]{0}', space=vmem, size = 0x10000, scoped, tag = 'input window, operand 3, single buffered']
    #allocation8 [shape = 'u8[65536]{0}', space=vmem, size = 0x10000, scoped, tag = 'input window, operand 5, single buffered']
    #allocation9 [shape = 's32[1]{0}', space=sflag, size = 0x4, scoped, tag = 'scoped memory for net_forward.1']
    #allocation10 [shape = 'u8[4096]{0}', space=vmem, size = 0x1000, scoped, tag = 'output window, operand 0, single buffered']
    %12 = vsyncpa [#allocation3], 0
    %13 = vsyncpa [#allocation6], 0
    %14 = vsyncpa [#allocation9], 0
    %15 = vsyncpa [#allocation4], 0
    // Predicated region
    $region2: #{net_forward.1} parent=1 // pred_check
      _
    $region3: #{net_forward.1} parent=1 // pred_check_branch
      %17 = sbr.rel (0) target = $region5
    $region4: #{net_forward.1} parent=1 // pred_region
      %s19 = ssub.s32 128, 128
      %20 = vsyncadd [#allocation3], %s19
      %s22 = sshll.u32 [#allocation2], 4
      %s23 = int_to_ptr.vmem [resolvable:$true] %s22
      %25 = dma.hbm_to_vmem [thread:$0]  %s0, 128, %s23, [#allocation3]
    $region5: #{net_forward.1} parent=1 // pred_fallthru
      _
    // Predicated region
    $region6: #{net_forward.1} parent=1 // pred_check
      _
    $region7: #{net_forward.1} parent=1 // pred_check_branch
      %27 = sbr.rel (0) target = $region9
    $region8: #{net_forward.1} parent=1 // pred_region
      %s29 = ssub.s32 1024, 1024
      %30 = vsyncadd [#allocation6], %s29
      %s31 = sshll.u32 [#allocation5], 4
      %s32 = int_to_ptr.vmem [resolvable:$true] %s31
      %37 = dma.hbm_to_vmem [thread:$0]  %s1, 1024, %s32, [#allocation6], 128, 128, 8
    $region9: #{net_forward.1} parent=1 // pred_fallthru
      _
    // Predicated region
    $region10: #{net_forward.1} parent=1 // pred_check
      _
    $region11: #{net_forward.1} parent=1 // pred_check_branch
      %39 = sbr.rel (0) target = $region13
    $region12: #{net_forward.1} parent=1 // pred_region
      _
    $region13: #{net_forward.1} parent=1 // pred_fallthru
      _
    // Predicated region
    $region14: #{net_forward.1} parent=1 // pred_check
      _
    $region15: #{net_forward.1} parent=1 // pred_check_branch
      %41 = sbr.rel (0) target = $region17
    $region16: #{net_forward.1} parent=1 // pred_region
      %s43 = ssub.s32 2048, 2048
      %44 = vsyncadd [#allocation6], %s43
      %s45 = sshll.u32 [#allocation7], 4
      %s46 = int_to_ptr.vmem [resolvable:$true] %s45
      %51 = dma.hbm_to_vmem [thread:$0]  %s3, 2048, %s46, [#allocation6], 128, 128, 8
    $region17: #{net_forward.1} parent=1 // pred_fallthru
      _
    // Predicated region
    $region18: #{net_forward.1} parent=1 // pred_check
      _
    $region19: #{net_forward.1} parent=1 // pred_check_branch
      %53 = sbr.rel (0) target = $region21
    $region20: #{net_forward.1} parent=1 // pred_region
      _
    $region21: #{net_forward.1} parent=1 // pred_fallthru
      _
    // Predicated region
    $region22: #{net_forward.1} parent=1 // pred_check
      _
    $region23: #{net_forward.1} parent=1 // pred_check_branch
      %55 = sbr.rel (0) target = $region25
    $region24: #{net_forward.1} parent=1 // pred_region
      %s57 = ssub.s32 2048, 2048
      %58 = vsyncadd [#allocation9], %s57
      %s59 = sshll.u32 [#allocation8], 4
      %s60 = int_to_ptr.vmem [resolvable:$true] %s59
      %65 = dma.hbm_to_vmem [thread:$0]  %s5, 2048, %s60, [#allocation9], 128, 128, 8
    $region25: #{net_forward.1} parent=1 // pred_fallthru
      _
    // Predicated region
    $region26: #{net_forward.1} parent=1 // pred_check
      _
    $region27: #{net_forward.1} parent=1 // pred_check_branch
      %67 = sbr.rel (0) target = $region29
    $region28: #{net_forward.1} parent=1 // pred_region
      _
    $region29: #{net_forward.1} parent=1 // pred_fallthru
      _
    // Predicated region
    $region30: #{net_forward.1} parent=1 // pred_check
      _
    $region31: #{net_forward.1} parent=1 // pred_check_branch
      %69 = sbr.rel (0) target = $region33
    $region32: #{net_forward.1} parent=1 // pred_region
      %70 = dma.done [#allocation3], 128
    $region33: #{net_forward.1} parent=1 // pred_fallthru
      _
    // Predicated region
    $region34: #{net_forward.1} parent=1 // pred_check
      _
    $region35: #{net_forward.1} parent=1 // pred_check_branch
      %72 = sbr.rel (0) target = $region37
    $region36: #{net_forward.1} parent=1 // pred_region
      %73 = dma.done [#allocation6], 1024
    $region37: #{net_forward.1} parent=1 // pred_fallthru
      _
    // Predicated region
    $region38: #{net_forward.1} parent=1 // pred_check
      _
    $region39: #{net_forward.1} parent=1 // pred_check_branch
      %75 = sbr.rel (0) target = $region41
    $region40: #{net_forward.1} parent=1 // pred_region
      %76 = dma.done [#allocation6], 2048
    $region41: #{net_forward.1} parent=1 // pred_fallthru
      _
    // Predicated region
    $region42: #{net_forward.1} parent=1 // pred_check
      _
    $region43: #{net_forward.1} parent=1 // pred_check_branch
      %78 = sbr.rel (0) target = $region45
    $region44: #{net_forward.1} parent=1 // pred_region
      %79 = dma.done [#allocation9], 2048
    $region45: #{net_forward.1} parent=1 // pred_fallthru
      _
    %v80 = vld [vmem:[#allocation2] sm:$0xff]
    %v81 = vld [vmem:[#allocation5] sm:$0xff]
    %v82 = vld [vmem:[#allocation5 + $0x8] sm:$0xff]
    %v83 = vld [vmem:[#allocation5 + $0x10] sm:$0xff]
    %v84 = vld [vmem:[#allocation5 + $0x18] sm:$0xff]
    %v85 = vld [vmem:[#allocation5 + $0x20] sm:$0xff]
    %v86 = vld [vmem:[#allocation5 + $0x28] sm:$0xff]
    %v87 = vld [vmem:[#allocation5 + $0x30] sm:$0xff]
    %v88 = vld [vmem:[#allocation5 + $0x38] sm:$0xff]
    %v89 = vld [vmem:[%s2] sm:$0x1]
    %v91 = vlaneseq
    %v92 = vshrl.u32 %v91, 7
    %v93 = vsub.s32 0, %v92
    %v94 = vrot.slane %v89, %v93
    %vm96 = vcmask 523264
    %v98 = vsel %vm96, %v80, 0
    %100 = vmatprep.subr.mxu0 0.0
    %101 = vmatpush1.msra.mxu0 %v81
    %102 = vmatprep.subr.mxu0 0.0
    %103 = vmatpush1.msra.mxu0 %v82
    %104 = vmatprep.subr.mxu0 0.0
    %105 = vmatpush1.msra.mxu0 %v83
    %106 = vmatprep.subr.mxu0 0.0
    %107 = vmatpush1.msra.mxu0 %v84
    %108 = vmatprep.subr.mxu0 0.0
    %109 = vmatpush1.msra.mxu0 %v85
    %110 = vmatprep.subr.mxu0 0.0
    %111 = vmatpush1.msra.mxu0 %v86
    %112 = vmatprep.subr.mxu0 0.0
    %113 = vmatpush1.msra.mxu0 %v87
    %114 = vmatprep.subr.mxu0 0.0
    %115 = vmatpush1.msra.mxu0 %v88
    %116 = vmatprep.subr.mxu0 0.0
    %117 = vmatpush1.msra.mxu0 0.0
    %118 = vmatprep.subr.mxu0 0.0
    %119 = vmatpush1.msra.mxu0 0.0
    %120 = vmatprep.subr.mxu0 0.0
    %121 = vmatpush1.msra.mxu0 0.0
    %122 = vmatprep.subr.mxu0 0.0
    %123 = vmatpush1.msra.mxu0 0.0
    %124 = vmatprep.subr.mxu0 0.0
    %125 = vmatpush1.msra.mxu0 0.0
    %126 = vmatprep.subr.mxu0 0.0
    %127 = vmatpush1.msra.mxu0 0.0
    %128 = vmatprep.subr.mxu0 0.0
    %129 = vmatpush1.msra.mxu0 0.0
    %130 = vmatprep.subr.mxu0 0.0
    %131 = vmatpush1.msra.mxu0 0.0
    %132 = vmatprep.subr.mxu0 0.0
    %133 = vmatpush1.msra.mxu0 0.0
    %134 = vmatprep.subr.mxu0 0.0
    %135 = vmatpush1.msra.mxu0 0.0
    %136 = vmatprep.subr.mxu0 0.0
    %137 = vmatpush1.msra.mxu0 0.0
    %138 = vmatprep.subr.mxu0 0.0
    %139 = vmatpush1.msra.mxu0 0.0
    %140 = vmatprep.subr.mxu0 0.0
    %141 = vmatpush1.msra.mxu0 0.0
    %142 = vmatprep.subr.mxu0 0.0
    %143 = vmatpush1.msra.mxu0 0.0
    %144 = vmatprep.subr.mxu0 0.0
    %145 = vmatpush1.msra.mxu0 0.0
    %146 = vmatprep.subr.mxu0 0.0
    %147 = vmatpush1.msra.mxu0 0.0
    %148 = vmatprep.subr.mxu0 0.0
    %149 = vmatpush1.msra.mxu0 0.0
    %150 = vmatprep.subr.mxu0 0.0
    %151 = vmatpush1.msra.mxu0 0.0
    %152 = vmatprep.subr.mxu0 0.0
    %153 = vmatpush1.msra.mxu0 0.0
    %154 = vmatprep.subr.mxu0 0.0
    %155 = vmatpush1.msra.mxu0 0.0
    %156 = vmatprep.subr.mxu0 0.0
    %157 = vmatpush1.msra.mxu0 0.0
    %158 = vmatprep.subr.mxu0 0.0
    %159 = vmatpush1.msra.mxu0 0.0
    %160 = vmatprep.subr.mxu0 0.0
    %161 = vmatpush1.msra.mxu0 0.0
    %162 = vmatprep.subr.mxu0 0.0
    %163 = vmatpush1.msra.mxu0 0.0
    %164 = vmatprep.mubr.f32.mxu0 0.0
    %165 = vmatmul.mubr.f32.gmra.mrb[0].mxu0 %v98
    %v166 = vpop.f32.mrb[0].mxu0
    %v167 = vadd.f32 %v94, %v166
    %v168 = vpop.f32.mrb[0].mxu0
    %169 = vdwg.mxu0
    %v170 = vmax.f32 %v167, 0.0
    %v171 = vld [vmem:[#allocation7] sm:$0xff]
    %v172 = vld [vmem:[#allocation7 + $0x8] sm:$0xff]
    %v173 = vld [vmem:[#allocation7 + $0x10] sm:$0xff]
    %v174 = vld [vmem:[#allocation7 + $0x18] sm:$0xff]
    %v175 = vld [vmem:[#allocation7 + $0x20] sm:$0xff]
    %v176 = vld [vmem:[#allocation7 + $0x28] sm:$0xff]
    %v177 = vld [vmem:[#allocation7 + $0x30] sm:$0xff]
    %v178 = vld [vmem:[#allocation7 + $0x38] sm:$0xff]
    %v179 = vld [vmem:[#allocation7 + $0x40] sm:$0xff]
    %v180 = vld [vmem:[#allocation7 + $0x48] sm:$0xff]
    %v181 = vld [vmem:[#allocation7 + $0x50] sm:$0xff]
    %v182 = vld [vmem:[#allocation7 + $0x58] sm:$0xff]
    %v183 = vld [vmem:[#allocation7 + $0x60] sm:$0xff]
    %v184 = vld [vmem:[#allocation7 + $0x68] sm:$0xff]
    %v185 = vld [vmem:[#allocation7 + $0x70] sm:$0xff]
    %v186 = vld [vmem:[#allocation7 + $0x78] sm:$0xff]
    %v187 = vld [vmem:[%s4] sm:$0x1]
    %v189 = vlaneseq
    %v190 = vshrl.u32 %v189, 7
    %v191 = vsub.s32 0, %v190
    %v192 = vrot.slane %v187, %v191
    %194 = vmatprep.subr.mxu0 0.0
    %195 = vmatpush1.msra.mxu0 %v171
    %196 = vmatprep.subr.mxu0 0.0
    %197 = vmatpush1.msra.mxu0 %v172
    %198 = vmatprep.subr.mxu0 0.0
    %199 = vmatpush1.msra.mxu0 %v173
    %200 = vmatprep.subr.mxu0 0.0
    %201 = vmatpush1.msra.mxu0 %v174
    %202 = vmatprep.subr.mxu0 0.0
    %203 = vmatpush1.msra.mxu0 %v175
    %204 = vmatprep.subr.mxu0 0.0
    %205 = vmatpush1.msra.mxu0 %v176
    %206 = vmatprep.subr.mxu0 0.0
    %207 = vmatpush1.msra.mxu0 %v177
    %208 = vmatprep.subr.mxu0 0.0
    %209 = vmatpush1.msra.mxu0 %v178
    %210 = vmatprep.subr.mxu0 0.0
    %211 = vmatpush1.msra.mxu0 %v179
    %212 = vmatprep.subr.mxu0 0.0
    %213 = vmatpush1.msra.mxu0 %v180
    %214 = vmatprep.subr.mxu0 0.0
    %215 = vmatpush1.msra.mxu0 %v181
    %216 = vmatprep.subr.mxu0 0.0
    %217 = vmatpush1.msra.mxu0 %v182
    %218 = vmatprep.subr.mxu0 0.0
    %219 = vmatpush1.msra.mxu0 %v183
    %220 = vmatprep.subr.mxu0 0.0
    %221 = vmatpush1.msra.mxu0 %v184
    %222 = vmatprep.subr.mxu0 0.0
    %223 = vmatpush1.msra.mxu0 %v185
    %224 = vmatprep.subr.mxu0 0.0
    %225 = vmatpush1.msra.mxu0 %v186
    %226 = vmatprep.subr.mxu0 0.0
    %227 = vmatpush1.msra.mxu0 0.0
    %228 = vmatprep.subr.mxu0 0.0
    %229 = vmatpush1.msra.mxu0 0.0
    %230 = vmatprep.subr.mxu0 0.0
    %231 = vmatpush1.msra.mxu0 0.0
    %232 = vmatprep.subr.mxu0 0.0
    %233 = vmatpush1.msra.mxu0 0.0
    %234 = vmatprep.subr.mxu0 0.0
    %235 = vmatpush1.msra.mxu0 0.0
    %236 = vmatprep.subr.mxu0 0.0
    %237 = vmatpush1.msra.mxu0 0.0
    %238 = vmatprep.subr.mxu0 0.0
    %239 = vmatpush1.msra.mxu0 0.0
    %240 = vmatprep.subr.mxu0 0.0
    %241 = vmatpush1.msra.mxu0 0.0
    %242 = vmatprep.subr.mxu0 0.0
    %243 = vmatpush1.msra.mxu0 0.0
    %244 = vmatprep.subr.mxu0 0.0
    %245 = vmatpush1.msra.mxu0 0.0
    %246 = vmatprep.subr.mxu0 0.0
    %247 = vmatpush1.msra.mxu0 0.0
    %248 = vmatprep.subr.mxu0 0.0
    %249 = vmatpush1.msra.mxu0 0.0
    %250 = vmatprep.subr.mxu0 0.0
    %251 = vmatpush1.msra.mxu0 0.0
    %252 = vmatprep.subr.mxu0 0.0
    %253 = vmatpush1.msra.mxu0 0.0
    %254 = vmatprep.subr.mxu0 0.0
    %255 = vmatpush1.msra.mxu0 0.0
    %256 = vmatprep.subr.mxu0 0.0
    %257 = vmatpush1.msra.mxu0 0.0
    %258 = vmatprep.mubr.f32.mxu0 0.0
    %259 = vmatmul.mubr.f32.gmra.mrb[0].mxu0 %v170
    %v260 = vpop.f32.mrb[0].mxu0
    %v261 = vadd.f32 %v192, %v260
    %v262 = vpop.f32.mrb[0].mxu0
    %263 = vdwg.mxu0
    %v264 = vmax.f32 %v261, 0.0
    %v265 = vld [vmem:[#allocation8] sm:$0xff]
    %v266 = vld [vmem:[#allocation8 + $0x8] sm:$0xff]
    %v267 = vld [vmem:[#allocation8 + $0x10] sm:$0xff]
    %v268 = vld [vmem:[#allocation8 + $0x18] sm:$0xff]
    %v269 = vld [vmem:[#allocation8 + $0x20] sm:$0xff]
    %v270 = vld [vmem:[#allocation8 + $0x28] sm:$0xff]
    %v271 = vld [vmem:[#allocation8 + $0x30] sm:$0xff]
    %v272 = vld [vmem:[#allocation8 + $0x38] sm:$0xff]
    %v273 = vld [vmem:[#allocation8 + $0x40] sm:$0xff]
    %v274 = vld [vmem:[#allocation8 + $0x48] sm:$0xff]
    %v275 = vld [vmem:[#allocation8 + $0x50] sm:$0xff]
    %v276 = vld [vmem:[#allocation8 + $0x58] sm:$0xff]
    %v277 = vld [vmem:[#allocation8 + $0x60] sm:$0xff]
    %v278 = vld [vmem:[#allocation8 + $0x68] sm:$0xff]
    %v279 = vld [vmem:[#allocation8 + $0x70] sm:$0xff]
    %v280 = vld [vmem:[#allocation8 + $0x78] sm:$0xff]
    %281 = vmatprep.subr.mxu0 0.0
    %282 = vmatpush1.msra.mxu0 %v265
    %283 = vmatprep.subr.mxu0 0.0
    %284 = vmatpush1.msra.mxu0 %v266
    %285 = vmatprep.subr.mxu0 0.0
    %286 = vmatpush1.msra.mxu0 %v267
    %287 = vmatprep.subr.mxu0 0.0
    %288 = vmatpush1.msra.mxu0 %v268
    %289 = vmatprep.subr.mxu0 0.0
    %290 = vmatpush1.msra.mxu0 %v269
    %291 = vmatprep.subr.mxu0 0.0
    %292 = vmatpush1.msra.mxu0 %v270
    %293 = vmatprep.subr.mxu0 0.0
    %294 = vmatpush1.msra.mxu0 %v271
    %295 = vmatprep.subr.mxu0 0.0
    %296 = vmatpush1.msra.mxu0 %v272
    %297 = vmatprep.subr.mxu0 0.0
    %298 = vmatpush1.msra.mxu0 %v273
    %299 = vmatprep.subr.mxu0 0.0
    %300 = vmatpush1.msra.mxu0 %v274
    %301 = vmatprep.subr.mxu0 0.0
    %302 = vmatpush1.msra.mxu0 %v275
    %303 = vmatprep.subr.mxu0 0.0
    %304 = vmatpush1.msra.mxu0 %v276
    %305 = vmatprep.subr.mxu0 0.0
    %306 = vmatpush1.msra.mxu0 %v277
    %307 = vmatprep.subr.mxu0 0.0
    %308 = vmatpush1.msra.mxu0 %v278
    %309 = vmatprep.subr.mxu0 0.0
    %310 = vmatpush1.msra.mxu0 %v279
    %311 = vmatprep.subr.mxu0 0.0
    %312 = vmatpush1.msra.mxu0 %v280
    %313 = vmatprep.subr.mxu0 0.0
    %314 = vmatpush1.msra.mxu0 0.0
    %315 = vmatprep.subr.mxu0 0.0
    %316 = vmatpush1.msra.mxu0 0.0
    %317 = vmatprep.subr.mxu0 0.0
    %318 = vmatpush1.msra.mxu0 0.0
    %319 = vmatprep.subr.mxu0 0.0
    %320 = vmatpush1.msra.mxu0 0.0
    %321 = vmatprep.subr.mxu0 0.0
    %322 = vmatpush1.msra.mxu0 0.0
    %323 = vmatprep.subr.mxu0 0.0
    %324 = vmatpush1.msra.mxu0 0.0
    %325 = vmatprep.subr.mxu0 0.0
    %326 = vmatpush1.msra.mxu0 0.0
    %327 = vmatprep.subr.mxu0 0.0
    %328 = vmatpush1.msra.mxu0 0.0
    %329 = vmatprep.subr.mxu0 0.0
    %330 = vmatpush1.msra.mxu0 0.0
    %331 = vmatprep.subr.mxu0 0.0
    %332 = vmatpush1.msra.mxu0 0.0
    %333 = vmatprep.subr.mxu0 0.0
    %334 = vmatpush1.msra.mxu0 0.0
    %335 = vmatprep.subr.mxu0 0.0
    %336 = vmatpush1.msra.mxu0 0.0
    %337 = vmatprep.subr.mxu0 0.0
    %338 = vmatpush1.msra.mxu0 0.0
    %339 = vmatprep.subr.mxu0 0.0
    %340 = vmatpush1.msra.mxu0 0.0
    %341 = vmatprep.subr.mxu0 0.0
    %342 = vmatpush1.msra.mxu0 0.0
    %343 = vmatprep.subr.mxu0 0.0
    %344 = vmatpush1.msra.mxu0 0.0
    %345 = vmatprep.mubr.f32.mxu0 0.0
    %346 = vmatmul.mubr.f32.gmra.mrb[0].mxu0 %v264
    %v347 = vpop.f32.mrb[0].mxu0
    %v348 = vadd.f32 0.0, %v347
    %v349 = vpop.f32.mrb[0].mxu0
    %350 = vdwg.mxu0
    %v351 = vld [vmem:[%s6] sm:$0x1]
    %v353 = vlaneseq
    %v354 = vshrl.u32 %v353, 7
    %v355 = vsub.s32 0, %v354
    %v356 = vrot.slane %v351, %v355
    %v358 = vadd.f32 %v348, %v356
    %vm359 = vcmask 64512
    %360 = vst.msk [vmem:[#allocation10] sm:$0xff] %vm359, %v358
    // Predicated region
    $region46: #{net_forward.1} parent=1 // pred_check
      _
    $region47: #{net_forward.1} parent=1 // pred_check_branch
      %362 = sbr.rel (0) target = $region49
    $region48: #{net_forward.1} parent=1 // pred_region
      %s364 = ssub.s32 128, 128
      %365 = vsyncadd [#allocation4], %s364
      %s367 = sshll.u32 [#allocation10], 4
      %s368 = int_to_ptr.vmem [resolvable:$true] %s367
      %370 = dma.vmem_to_hbm [thread:$0]  %s368, 128, %s7, [#allocation4]
    $region49: #{net_forward.1} parent=1 // pred_fallthru
      _
    // Predicated region
    $region50: #{net_forward.1} parent=1 // pred_check
      _
    $region51: #{net_forward.1} parent=1 // pred_check_branch
      %372 = sbr.rel (0) target = $region53
    $region52: #{net_forward.1} parent=1 // pred_region
      %373 = dma.done [#allocation4], 128
    $region53: #{net_forward.1} parent=1 // pred_fallthru
      _
    %374 = vsyncpa [#allocation3], 1
    %375 = vsyncpa [#allocation6], 1
    %376 = vsyncpa [#allocation9], 1
    %377 = vsyncpa [#allocation4], 1

</llo_original>
